<compile_context>
chip_gen: v7x
topology: tpu7x:2x2x1
jax: 0.10.0
libtpu: 0.0.40
codegen_flags: <defaults>
</compile_context>

<pallas_src>
import functools
import math

import jax
import jax.numpy as jnp
from jax.experimental import pallas as pl
from jax.experimental.pallas import tpu as pltpu


def _round_up(x, m):
    return ((x + m - 1) // m) * m


def _vmem_footprint_bytes(tq, tk, d, itemsize):
    """Rough double-buffered working-set estimate for tile selection."""
    io_tiles = 2 * (tq * d + 2 * tk * d + tq * d) * itemsize   # Q, K, V, O (x2 buffers)
    scratch = (tq * d + 2 * tq) * 4                            # f32 acc, m, l
    bias = 2 * tk * 4                                          # bias row (x2 buffers)
    interm = 4 * tq * tk * 4                                   # s / p f32 temporaries
    return io_tiles + scratch + bias + interm


def _flash_attention_kernel(q_ref, k_ref, v_ref, *rest,
                            scale, scale_in_q, needs_mask):
    if needs_mask:
        bias_ref, o_ref, m_ref, l_ref, acc_ref = rest
    else:
        o_ref, m_ref, l_ref, acc_ref = rest

    ki = pl.program_id(2)

    @pl.when(ki == 0)
    def _():
        m_ref[...] = jnp.full_like(m_ref, -jnp.inf)
        l_ref[...] = jnp.zeros_like(l_ref)
        acc_ref[...] = jnp.zeros_like(acc_ref)

    q = q_ref[0]                                                 # (tq, D)
    if scale_in_q:
        # f32 inputs: fold 1/sqrt(D) into Q (Lq*D mults instead of Lq*Lk).
        q = q * jnp.asarray(scale, dtype=q.dtype)
    k = k_ref[0]                                                 # (tk, D)
    v = v_ref[0]                                                 # (tk, D)

    # Q @ K^T by contracting the shared D axis directly -- no explicit .T,
    # native-dtype MXU operands with f32 accumulation.
    s = jax.lax.dot_general(
        q, k, dimension_numbers=(((1,), (1,)), ((), ())),
        preferred_element_type=jnp.float32)                      # (tq, tk) f32

    if not scale_in_q:
        # Low-precision inputs: scale the f32 scores instead (no bf16 VALU
        # dependence, no rounding of the scale into bf16).
        s = s * jnp.float32(scale)

    if needs_mask:
        # Additive bias row (0 for valid keys, -1e30 for padding): one VPU
        # add instead of iota + compare + select on every Lk tile.
        s = s + bias_ref[...]                                    # (1, tk) bcast

    # Online (streaming) softmax across Lk tiles.
    m_prev = m_ref[...]                                          # (tq, 1)
    m_new = jnp.maximum(m_prev, jnp.max(s, axis=-1, keepdims=True))
    alpha = jnp.exp(m_prev - m_new)
    p = jnp.exp(s - m_new)                                       # (tq, tk) f32
    l_ref[...] = alpha * l_ref[...] + jnp.sum(p, axis=-1, keepdims=True)
    acc_ref[...] = alpha * acc_ref[...] + jnp.dot(
        p.astype(v.dtype), v, preferred_element_type=jnp.float32)
    m_ref[...] = m_new

    @pl.when(ki == pl.num_programs(2) - 1)
    def _():
        # EUP reciprocal + multiply instead of a broadcast divide.
        inv_l = pl.reciprocal(l_ref[...], approx=False)
        o_ref[0] = (acc_ref[...] * inv_l).astype(o_ref.dtype)


def attention(queries, keys, values, *, tq_max=256, tk_max=512):
    """Scaled dot-product attention via a tiled flash-attention Pallas kernel.

    queries: (B, Lq, D), keys/values: (B, Lk, D) -> (B, Lq, D)
    """
    B, Lq, D = queries.shape
    Bk, Lk, Dk = keys.shape
    assert Bk == B and Dk == D and values.shape == keys.shape
    assert Lk > 0, "attention over zero keys is undefined (softmax of empty set)"

    scale = 1.0 / math.sqrt(D)
    itemsize = jnp.dtype(queries.dtype).itemsize
    # Fold scale into Q only for f32 inputs; otherwise scale the f32 scores.
    scale_in_q = queries.dtype == jnp.float32

    # 8-aligned query tiles (sublane axis of the score tile), 128-aligned key
    # tiles (lane axis).  Start big (fills the 256-wide MXU on v6e/v7x and
    # halves K/V HBM re-reads) and shrink only if the footprint estimate
    # threatens scoped VMEM.
    tq = min(tq_max, _round_up(Lq, 8))
    tk = min(tk_max, _round_up(Lk, 128))

    vmem_budget = 40 * 1024 * 1024
    while _vmem_footprint_bytes(tq, tk, D, itemsize) > vmem_budget and tk > 128:
        tk = max(128, _round_up(tk // 2, 128))
    while _vmem_footprint_bytes(tq, tk, D, itemsize) > vmem_budget and tq > 8:
        tq = max(8, _round_up(tq // 2, 8))

    lq_pad = _round_up(Lq, tq)
    # Make sure the two parallel grid axes give both v7x TensorCores work.
    if B * (lq_pad // tq) < 2 and tq > 8:
        tq = max(8, _round_up(tq // 2, 8))
        lq_pad = _round_up(Lq, tq)
    lk_pad = _round_up(Lk, tk)

    if lq_pad != Lq:
        queries = jnp.pad(queries, ((0, 0), (0, lq_pad - Lq), (0, 0)))
    needs_mask = lk_pad != Lk
    if needs_mask:
        keys = jnp.pad(keys, ((0, 0), (0, lk_pad - Lk), (0, 0)))
        values = jnp.pad(values, ((0, 0), (0, lk_pad - Lk), (0, 0)))
        # Additive key-padding bias: 0 on valid keys, -1e30 on padding.
        bias = jnp.where(jnp.arange(lk_pad)[None, :] < Lk,
                         jnp.float32(0.0), jnp.float32(-1e30))   # (1, lk_pad)

    num_q_tiles = lq_pad // tq
    grid = (B, num_q_tiles, lk_pad // tk)

    kernel = functools.partial(
        _flash_attention_kernel,
        scale=scale, scale_in_q=scale_in_q, needs_mask=needs_mask)

    in_specs = [
        pl.BlockSpec((1, tq, D), lambda b, qi, ki: (b, qi, 0)),
        pl.BlockSpec((1, tk, D), lambda b, qi, ki: (b, ki, 0)),
        pl.BlockSpec((1, tk, D), lambda b, qi, ki: (b, ki, 0)),
    ]
    inputs = [queries, keys, values]
    if needs_mask:
        in_specs.append(pl.BlockSpec((1, tk), lambda b, qi, ki: (0, ki)))
        inputs.append(bias)

    # Advisory cost so XLA schedules surrounding ops around the custom call.
    cost = pl.CostEstimate(
        flops=int(4 * B * lq_pad * lk_pad * D),
        transcendentals=int(B * lq_pad * lk_pad),
        bytes_accessed=int(itemsize * B * (lq_pad * D                 # Q read
                                           + 2 * lk_pad * D * num_q_tiles  # K/V re-reads
                                           + lq_pad * D)),            # O write
    )

    vmem_limit = int(min(48 * 1024 * 1024,
                         max(32 * 1024 * 1024,
                             2 * _vmem_footprint_bytes(tq, tk, D, itemsize))))

    out = pl.pallas_call(
        kernel,
        out_shape=jax.ShapeDtypeStruct((B, lq_pad, D), queries.dtype),
        grid_spec=pltpu.PrefetchScalarGridSpec(
            num_scalar_prefetch=0,
            grid=grid,
            in_specs=in_specs,
            out_specs=pl.BlockSpec((1, tq, D), lambda b, qi, ki: (b, qi, 0)),
            scratch_shapes=[
                pltpu.VMEM((tq, 1), jnp.float32),   # running max m
                pltpu.VMEM((tq, 1), jnp.float32),   # running denom l
                pltpu.VMEM((tq, D), jnp.float32),   # f32 output accumulator
            ],
        ),
        compiler_params=pltpu.CompilerParams(
            # B and Lq tiles are independent (megacore-shardable on v7x);
            # the Lk reduction axis must stay sequential.
            dimension_semantics=("parallel", "parallel", "arbitrary"),
            vmem_limit_bytes=vmem_limit,
        ),
        cost_estimate=cost,
    )(*inputs)

    if lq_pad != Lq:
        out = out[:, :Lq, :]
    return out


def attention_ref(queries, keys, values):
    """Pure-JAX reference for correctness checking."""
    D = queries.shape[-1]
    s = jnp.einsum("bqd,bkd->bqk", queries.astype(jnp.float32),
                   keys.astype(jnp.float32)) / math.sqrt(D)
    p = jax.nn.softmax(s, axis=-1)
    return jnp.einsum("bqk,bkd->bqd", p,
                      values.astype(jnp.float32)).astype(queries.dtype)


if __name__ == "__main__":
    key = jax.random.PRNGKey(0)
    kq, kk, kv = jax.random.split(key, 3)

    # Small shapes consistent with the (queries, keys, values) interface.
    B, Lq, Lk, D = 2, 8, 8, 32
    queries = jax.random.normal(kq, (B, Lq, D), dtype=jnp.float32)
    keys = jax.random.normal(kk, (B, Lk, D), dtype=jnp.float32)
    values = jax.random.normal(kv, (B, Lk, D), dtype=jnp.float32)

    out = jax.block_until_ready(attention(queries, keys, values))
    ref = attention_ref(queries, keys, values)
    assert out.shape == (B, Lq, D)
    assert jnp.allclose(out, ref, atol=1e-4, rtol=1e-4), \
        float(jnp.max(jnp.abs(out - ref)))

    # Multi-tile path: online-softmax carry across Lk tiles, multiple Lq
    # tiles, and the additive key-padding bias on the last Lk tile.
    B2, Lq2, Lk2, D2 = 2, 512, 640, 64
    kq2, kk2, kv2 = jax.random.split(jax.random.PRNGKey(0), 3)
    q2 = jax.random.normal(kq2, (B2, Lq2, D2), dtype=jnp.float32)
    k2 = jax.random.normal(kk2, (B2, Lk2, D2), dtype=jnp.float32)
    v2 = jax.random.normal(kv2, (B2, Lk2, D2), dtype=jnp.float32)
    out2 = jax.block_until_ready(attention(q2, k2, v2))
    ref2 = attention_ref(q2, k2, v2)
    assert out2.shape == (B2, Lq2, D2)
    assert jnp.allclose(out2, ref2, atol=1e-4, rtol=1e-4), \
        float(jnp.max(jnp.abs(out2 - ref2)))

    # Low-precision path (scale applied to f32 scores instead of bf16 Q).
    B3, Lq3, Lk3, D3 = 2, 128, 384, 64
    kq3, kk3, kv3 = jax.random.split(jax.random.PRNGKey(0), 3)
    q3 = jax.random.normal(kq3, (B3, Lq3, D3), dtype=jnp.bfloat16)
    k3 = jax.random.normal(kk3, (B3, Lk3, D3), dtype=jnp.bfloat16)
    v3 = jax.random.normal(kv3, (B3, Lk3, D3), dtype=jnp.bfloat16)
    out3 = jax.block_until_ready(attention(q3, k3, v3))
    ref3 = attention_ref(q3, k3, v3)
    assert out3.shape == (B3, Lq3, D3)
    assert jnp.allclose(out3.astype(jnp.float32), ref3.astype(jnp.float32),
                        atol=2e-2, rtol=2e-2), \
        float(jnp.max(jnp.abs(out3.astype(jnp.float32) - ref3.astype(jnp.float32))))

    print("KERNEL_OK")
</pallas_src>

<mosaic_0001>
module attributes {stable_mosaic.version = 11 : i64} {
  func.func @_flash_attention_kernel(%arg0: i32, %arg1: i32, %arg2: i32, %arg3: memref<1x8x32xf32, #tpu.memory_space<vmem>>, %arg4: memref<1x128x32xf32, #tpu.memory_space<vmem>>, %arg5: memref<1x128x32xf32, #tpu.memory_space<vmem>>, %arg6: memref<1x128xf32, #tpu.memory_space<vmem>>, %arg7: memref<1x8x32xf32, #tpu.memory_space<vmem>>, %arg8: memref<8x1xf32, #tpu.memory_space<vmem>>, %arg9: memref<8x1xf32, #tpu.memory_space<vmem>>, %arg10: memref<8x32xf32, #tpu.memory_space<vmem>>) attributes {dimension_semantics = [#tpu.dimension_semantics<parallel>, #tpu.dimension_semantics<parallel>, #tpu.dimension_semantics<arbitrary>], iteration_bounds = array<i64: 2, 1, 1>, scalar_prefetch = 0 : i64, scratch_operands = 3 : i64, tpu.core_type = #tpu.core_type<tc>, window_params = [{transform_indices = @transform_0, window_bounds = array<i64: 1, 8, 32>}, {transform_indices = @transform_1, window_bounds = array<i64: 1, 128, 32>}, {transform_indices = @transform_2, window_bounds = array<i64: 1, 128, 32>}, {transform_indices = @transform_3, window_bounds = array<i64: 1, 128>}, {transform_indices = @transform_4, window_bounds = array<i64: 1, 8, 32>}]} {
    %c0_i32 = arith.constant 0 : i32
    %0 = arith.cmpi eq, %arg2, %c0_i32 : i32
    %1 = arith.extui %0 : i1 to i32
    %c0_i32_0 = arith.constant 0 : i32
    %2 = arith.cmpi ne, %1, %c0_i32_0 : i32
    scf.if %2 {
      %cst_29 = arith.constant 0xFF800000 : f32
      %40 = vector.broadcast %cst_29 : f32 to vector<8x1xf32>
      %c0_30 = arith.constant 0 : index
      %c0_31 = arith.constant 0 : index
      %41 = vector.load %arg8[%c0_30, %c0_31] : memref<8x1xf32, #tpu.memory_space<vmem>>, vector<8x1xf32>
      tpu.vector_store %arg8[%c0_30, %c0_31], %40 {strides = array<i32>} : memref<8x1xf32, #tpu.memory_space<vmem>>, vector<8x1xf32>,
      %cst_32 = arith.constant 0.000000e+00 : f32
      %42 = vector.broadcast %cst_32 : f32 to vector<8x1xf32>
      %c0_33 = arith.constant 0 : index
      %c0_34 = arith.constant 0 : index
      %43 = vector.load %arg9[%c0_33, %c0_34] : memref<8x1xf32, #tpu.memory_space<vmem>>, vector<8x1xf32>
      tpu.vector_store %arg9[%c0_33, %c0_34], %42 {strides = array<i32>} : memref<8x1xf32, #tpu.memory_space<vmem>>, vector<8x1xf32>,
      %cst_35 = arith.constant 0.000000e+00 : f32
      %44 = vector.broadcast %cst_35 : f32 to vector<8x32xf32>
      %c0_36 = arith.constant 0 : index
      %c0_37 = arith.constant 0 : index
      %45 = vector.load %arg10[%c0_36, %c0_37] : memref<8x32xf32, #tpu.memory_space<vmem>>, vector<8x32xf32>
      tpu.vector_store %arg10[%c0_36, %c0_37], %44 {strides = array<i32>} : memref<8x32xf32, #tpu.memory_space<vmem>>, vector<8x32xf32>,
    } else {
    }
    %c0 = arith.constant 0 : index
    %c0_1 = arith.constant 0 : index
    %c0_2 = arith.constant 0 : index
    %3 = vector.load %arg3[%c0, %c0_1, %c0_2] : memref<1x8x32xf32, #tpu.memory_space<vmem>>, vector<1x8x32xf32>
    %4 = vector.shape_cast %3 : vector<1x8x32xf32> to vector<8x32xf32>
    %cst = arith.constant 0.176776692 : f32
    %5 = vector.broadcast %cst : f32 to vector<8x32xf32>
    %6 = arith.mulf %4, %5 : vector<8x32xf32>
    %c0_3 = arith.constant 0 : index
    %c0_4 = arith.constant 0 : index
    %c0_5 = arith.constant 0 : index
    %7 = vector.load %arg4[%c0_3, %c0_4, %c0_5] : memref<1x128x32xf32, #tpu.memory_space<vmem>>, vector<1x128x32xf32>
    %8 = vector.shape_cast %7 : vector<1x128x32xf32> to vector<128x32xf32>
    %c0_6 = arith.constant 0 : index
    %c0_7 = arith.constant 0 : index
    %c0_8 = arith.constant 0 : index
    %9 = vector.load %arg5[%c0_6, %c0_7, %c0_8] : memref<1x128x32xf32, #tpu.memory_space<vmem>>, vector<1x128x32xf32>
    %10 = vector.shape_cast %9 : vector<1x128x32xf32> to vector<128x32xf32>
    %cst_9 = arith.constant dense<0.000000e+00> : vector<8x128xf32>
    %11 = tpu.matmul %6, %8, %cst_9 {dimension_numbers = #tpu.dot_dimension_numbers<[1], [1], [0], [0], [0, 0, 1, 0], [], []>} : vector<8x32xf32>, vector<128x32xf32>, vector<8x128xf32> -> vector<8x128xf32>
    %c0_10 = arith.constant 0 : index
    %c0_11 = arith.constant 0 : index
    %12 = vector.load %arg6[%c0_10, %c0_11] : memref<1x128xf32, #tpu.memory_space<vmem>>, vector<1x128xf32>
    %13 = vector.broadcast %12 : vector<1x128xf32> to vector<8x128xf32>
    %14 = arith.addf %11, %13 : vector<8x128xf32>
    %c0_12 = arith.constant 0 : index
    %c0_13 = arith.constant 0 : index
    %15 = vector.load %arg8[%c0_12, %c0_13] : memref<8x1xf32, #tpu.memory_space<vmem>>, vector<8x1xf32>
    %cst_14 = arith.constant dense<0xFF800000> : vector<8xf32>
    %16 = vector.multi_reduction <maximumf>, %14, %cst_14 [1] : vector<8x128xf32> to vector<8xf32>
    %17 = vector.shape_cast %16 : vector<8xf32> to vector<8x1xf32>
    %18 = arith.maximumf %15, %17 : vector<8x1xf32>
    %19 = arith.subf %15, %18 : vector<8x1xf32>
    %20 = math.exp %19 : vector<8x1xf32>
    %21 = vector.broadcast %18 : vector<8x1xf32> to vector<8x128xf32>
    %22 = arith.subf %14, %21 : vector<8x128xf32>
    %23 = math.exp %22 : vector<8x128xf32>
    %c0_15 = arith.constant 0 : index
    %c0_16 = arith.constant 0 : index
    %24 = vector.load %arg9[%c0_15, %c0_16] : memref<8x1xf32, #tpu.memory_space<vmem>>, vector<8x1xf32>
    %25 = arith.mulf %20, %24 : vector<8x1xf32>
    %cst_17 = arith.constant dense<0.000000e+00> : vector<8xf32>
    %26 = vector.multi_reduction <add>, %23, %cst_17 [1] : vector<8x128xf32> to vector<8xf32>
    %27 = vector.shape_cast %26 : vector<8xf32> to vector<8x1xf32>
    %28 = arith.addf %25, %27 : vector<8x1xf32>
    %c0_18 = arith.constant 0 : index
    %c0_19 = arith.constant 0 : index
    %29 = vector.load %arg9[%c0_18, %c0_19] : memref<8x1xf32, #tpu.memory_space<vmem>>, vector<8x1xf32>
    tpu.vector_store %arg9[%c0_18, %c0_19], %28 {strides = array<i32>} : memref<8x1xf32, #tpu.memory_space<vmem>>, vector<8x1xf32>,
    %c0_20 = arith.constant 0 : index
    %c0_21 = arith.constant 0 : index
    %30 = vector.load %arg10[%c0_20, %c0_21] : memref<8x32xf32, #tpu.memory_space<vmem>>, vector<8x32xf32>
    %31 = vector.broadcast %20 : vector<8x1xf32> to vector<8x32xf32>
    %32 = arith.mulf %31, %30 : vector<8x32xf32>
    %cst_22 = arith.constant dense<0.000000e+00> : vector<8x32xf32>
    %33 = tpu.matmul %23, %10, %cst_22 {dimension_numbers = #tpu.dot_dimension_numbers<[1], [0], [0], [1], [0, 0, 1, 1], [], []>} : vector<8x128xf32>, vector<128x32xf32>, vector<8x32xf32> -> vector<8x32xf32>
    %34 = arith.addf %32, %33 : vector<8x32xf32>
    %c0_23 = arith.constant 0 : index
    %c0_24 = arith.constant 0 : index
    %35 = vector.load %arg10[%c0_23, %c0_24] : memref<8x32xf32, #tpu.memory_space<vmem>>, vector<8x32xf32>
    tpu.vector_store %arg10[%c0_23, %c0_24], %34 {strides = array<i32>} : memref<8x32xf32, #tpu.memory_space<vmem>>, vector<8x32xf32>,
    %c0_25 = arith.constant 0 : index
    %c0_26 = arith.constant 0 : index
    %36 = vector.load %arg8[%c0_25, %c0_26] : memref<8x1xf32, #tpu.memory_space<vmem>>, vector<8x1xf32>
    tpu.vector_store %arg8[%c0_25, %c0_26], %18 {strides = array<i32>} : memref<8x1xf32, #tpu.memory_space<vmem>>, vector<8x1xf32>,
    %c0_i32_27 = arith.constant 0 : i32
    %37 = arith.cmpi eq, %arg2, %c0_i32_27 : i32
    %38 = arith.extui %37 : i1 to i32
    %c0_i32_28 = arith.constant 0 : i32
    %39 = arith.cmpi ne, %38, %c0_i32_28 : i32
    scf.if %39 {
      %c0_29 = arith.constant 0 : index
      %c0_30 = arith.constant 0 : index
      %40 = vector.load %arg9[%c0_29, %c0_30] : memref<8x1xf32, #tpu.memory_space<vmem>>, vector<8x1xf32>
      %41 = tpu.reciprocal %40 : vector<8x1xf32> -> vector<8x1xf32>
      %c0_31 = arith.constant 0 : index
      %c0_32 = arith.constant 0 : index
      %42 = vector.load %arg10[%c0_31, %c0_32] : memref<8x32xf32, #tpu.memory_space<vmem>>, vector<8x32xf32>
      %43 = vector.broadcast %41 : vector<8x1xf32> to vector<8x32xf32>
      %44 = arith.mulf %42, %43 : vector<8x32xf32>
      %c0_33 = arith.constant 0 : index
      %c0_34 = arith.constant 0 : index
      %c0_35 = arith.constant 0 : index
      %45 = vector.load %arg7[%c0_33, %c0_34, %c0_35] : memref<1x8x32xf32, #tpu.memory_space<vmem>>, vector<1x8x32xf32>
      %46 = vector.shape_cast %45 : vector<1x8x32xf32> to vector<8x32xf32>
      %47 = vector.shape_cast %44 : vector<8x32xf32> to vector<1x8x32xf32>
      tpu.vector_store %arg7[%c0_33, %c0_34, %c0_35], %47 {strides = array<i32>} : memref<1x8x32xf32, #tpu.memory_space<vmem>>, vector<1x8x32xf32>,
    } else {
    }
    return
  }
  func.func @transform_0(%arg0: i32, %arg1: i32, %arg2: i32) -> (i32, i32, i32) {
    %c0_i32 = arith.constant 0 : i32
    %c0_i32_0 = arith.constant 0 : i32
    return %arg0, %arg1, %c0_i32 : i32, i32, i32
  }
  func.func @transform_1(%arg0: i32, %arg1: i32, %arg2: i32) -> (i32, i32, i32) {
    %c0_i32 = arith.constant 0 : i32
    %c0_i32_0 = arith.constant 0 : i32
    return %arg0, %arg2, %c0_i32 : i32, i32, i32
  }
  func.func @transform_2(%arg0: i32, %arg1: i32, %arg2: i32) -> (i32, i32, i32) {
    %c0_i32 = arith.constant 0 : i32
    %c0_i32_0 = arith.constant 0 : i32
    return %arg0, %arg2, %c0_i32 : i32, i32, i32
  }
  func.func @transform_3(%arg0: i32, %arg1: i32, %arg2: i32) -> (i32, i32) {
    %c0_i32 = arith.constant 0 : i32
    %c0_i32_0 = arith.constant 0 : i32
    return %c0_i32, %arg2 : i32, i32
  }
  func.func @transform_4(%arg0: i32, %arg1: i32, %arg2: i32) -> (i32, i32, i32) {
    %c0_i32 = arith.constant 0 : i32
    %c0_i32_0 = arith.constant 0 : i32
    return %arg0, %arg1, %c0_i32 : i32, i32, i32
  }
}

</mosaic_0001>

<llo_original>
// kernel: tpu_custom_call.1
$region0: #{tpu_custom_call.1}
  #allocation0 [shape = 'u32[]', space=smem, size = 0x4, offset = 0x4, fixed_abs, tag = 'smem constant byte address 0x4 - core index']
  #allocation1 [shape = 'u32[144,128]{1,0:T(1,128)}', space=vmem, size = 0x12000, scoped, tag = 'internal scratch']
  #allocation2 [shape = 'f32[8,1]{1,0:T(8,128)}', space=vmem, size = 0x1000, scoped, tag = 'scratch operand']
  #allocation3 [shape = 'f32[8,1]{1,0:T(8,128)}', space=vmem, size = 0x1000, scoped, tag = 'scratch operand']
  #allocation4 [shape = 'f32[8,32]{1,0:T(8,128)}', space=vmem, size = 0x1000, scoped, tag = 'scratch operand']
  %s0 = inlined_call_operand.vmem [shape: f32[2,8,32], index: 0, kind: input, shape index: {}]
  %s1 = inlined_call_operand.vmem [shape: f32[2,128,32], index: 1, kind: input, shape index: {}]
  %s2 = inlined_call_operand.vmem [shape: f32[2,128,32], index: 2, kind: input, shape index: {}]
  %s3 = inlined_call_operand.vmem [shape: f32[1,128], index: 3, kind: input, shape index: {}]
  %s4 = inlined_call_operand.hbm [shape: f32[2,8,32], index: 4, kind: output, shape index: {}]
  %s5 = sld [smem:[#allocation0]]
  $region57: #{tpu_custom_call.1} parent=0
    _
  %s7 = ssub.s32 1, %s5
  %s8 = scalar_select 0, %s7, %s5
  $region1: #{tpu_custom_call.1} parent=0
    #allocation5 [shape = 'u8[8192]{0}', space=vmem, size = 0x2000, scoped, tag = 'output window, operand 0']
    #allocation6 [shape = 's32[2]{0}', space=sflag, size = 0x8, scoped, tag = 'scoped memory for tpu_custom_call.1']
    %9 = vsyncpa [#allocation6], 0
    %s10 = scalar_lea.sflag [#allocation6], 1
    %11 = vsyncpa %s10, 0
    loop: start=0, step=1, limit=4
    $region2: #{tpu_custom_call.1} parent=1 // loop_pre_header
      _
    $region3: #{tpu_custom_call.1} parent=1 // loop_header
      %s13 = sphi 0, %s17
      %p14 = scmp.ge.s32.totalorder %s13, 4
      %s20 = sphi 0, %s39
      %s21 = sphi 0, %s35
      %s22 = sphi 0, %s31
      %s23 = sphi 0, %s20
      %s24 = sphi 0, %s21
      %s25 = sphi 0, %s22
      %s26 = sphi 0, %s23
      %s27 = sphi 0, %s24
      %s28 = sphi 0, %s25
      %s44 = sphi 0, %s46
      %s47 = sphi 0, %s44
      %s48 = sphi 0, %s47
      %s64 = sphi 0, %s48
      %s72 = sphi 0, %s74
      %s75 = sphi 0, %s72
      %s76 = sphi 0, %s75
      %s92 = sphi 0, %s76
      %s100 = sphi 0, %s102
      %s103 = sphi 0, %s100
      %s104 = sphi 0, %s103
      %s120 = sphi 0, %s104
      %s126 = sphi 0, %s128
      %s129 = sphi 0, %s126
      %s130 = sphi 0, %s129
      %s146 = sphi 0, %s130
      %s154 = sphi 0, %s156
      %s157 = sphi 0, %s154
      %s158 = sphi 0, %s157
      %s174 = sphi 0, %s158
    $region4: #{tpu_custom_call.1} parent=1 // loop_header_branch
      %16 = sbr.rel (%p14) target = $region8
    $region5: #{tpu_custom_call.1} parent=1 // loop_body
      %s18 = ssub.s32 %s13, 1
      %s19 = ssub.s32 %s13, 2
      %s29 = sadd.s32 1, %s22
      %p30 = scmp.ge.s32.totalorder %s29, 1
      %s31 = scalar_select %p30, 0, %s29
      %s32 = sadd.s32 1, %s21
      %s33 = scalar_select %p30, %s32, %s21
      %p34 = scmp.ge.s32.totalorder %s33, 1
      %s35 = scalar_select %p34, 0, %s33
      %s36 = sadd.s32 1, %s20
      %s37 = scalar_select %p34, %s36, %s20
      %p38 = scmp.ge.s32.totalorder %s37, 2
      %s39 = scalar_select %p38, 0, %s37
      %s40 = ssub.s32 %s20, %s39
      %s41 = ssub.s32 %s21, %s35
      %s42 = sor.u32 %s40, %s41
      %p43 = scmp.eq.s32.totalorder %s42, 0
      %s45 = sadd.s32 %s44, 1
      %s46 = scalar_select %p43, %s44, %s45
      %p49 = pneg %p43
      %p50 = scmp.eq.s32.totalorder %s13, 1
      %p51 = por %p49, %p50
      %p52 = scmp.ne.s32.totalorder %s44, %s47
      %p53 = scmp.eq.s32.totalorder %s13, 0
      %p54 = por %p52, %p53
      %p55 = scmp.ne.s32.totalorder %s44, %s47
      %p56 = scmp.eq.s32.totalorder %s18, 1
      %p57 = por %p55, %p56
      %p58 = scmp.ne.s32.totalorder %s47, %s48
      %p59 = scmp.eq.s32.totalorder %s18, 0
      %p60 = por %p58, %p59
      %p61 = scmp.ne.s32.totalorder %s47, %s48
      %p62 = scmp.eq.s32.totalorder %s19, 1
      %p63 = por %p61, %p62
      %p65 = scmp.ne.s32.totalorder %s48, %s64
      %p66 = scmp.eq.s32.totalorder %s19, 0
      %p67 = por %p65, %p66
      %s68 = ssub.s32 %s20, %s39
      %s69 = ssub.s32 %s22, %s31
      %s70 = sor.u32 %s68, %s69
      %p71 = scmp.eq.s32.totalorder %s70, 0
      %s73 = sadd.s32 %s72, 1
      %s74 = scalar_select %p71, %s72, %s73
      %p77 = pneg %p71
      %p78 = scmp.eq.s32.totalorder %s13, 1
      %p79 = por %p77, %p78
      %p80 = scmp.ne.s32.totalorder %s72, %s75
      %p81 = scmp.eq.s32.totalorder %s13, 0
      %p82 = por %p80, %p81
      %p83 = scmp.ne.s32.totalorder %s72, %s75
      %p84 = scmp.eq.s32.totalorder %s18, 1
      %p85 = por %p83, %p84
      %p86 = scmp.ne.s32.totalorder %s75, %s76
      %p87 = scmp.eq.s32.totalorder %s18, 0
      %p88 = por %p86, %p87
      %p89 = scmp.ne.s32.totalorder %s75, %s76
      %p90 = scmp.eq.s32.totalorder %s19, 1
      %p91 = por %p89, %p90
      %p93 = scmp.ne.s32.totalorder %s76, %s92
      %p94 = scmp.eq.s32.totalorder %s19, 0
      %p95 = por %p93, %p94
      %s96 = ssub.s32 %s20, %s39
      %s97 = ssub.s32 %s22, %s31
      %s98 = sor.u32 %s96, %s97
      %p99 = scmp.eq.s32.totalorder %s98, 0
      %s101 = sadd.s32 %s100, 1
      %s102 = scalar_select %p99, %s100, %s101
      %p105 = pneg %p99
      %p106 = scmp.eq.s32.totalorder %s13, 1
      %p107 = por %p105, %p106
      %p108 = scmp.ne.s32.totalorder %s100, %s103
      %p109 = scmp.eq.s32.totalorder %s13, 0
      %p110 = por %p108, %p109
      %p111 = scmp.ne.s32.totalorder %s100, %s103
      %p112 = scmp.eq.s32.totalorder %s18, 1
      %p113 = por %p111, %p112
      %p114 = scmp.ne.s32.totalorder %s103, %s104
      %p115 = scmp.eq.s32.totalorder %s18, 0
      %p116 = por %p114, %p115
      %p117 = scmp.ne.s32.totalorder %s103, %s104
      %p118 = scmp.eq.s32.totalorder %s19, 1
      %p119 = por %p117, %p118
      %p121 = scmp.ne.s32.totalorder %s104, %s120
      %p122 = scmp.eq.s32.totalorder %s19, 0
      %p123 = por %p121, %p122
      %s124 = ssub.s32 %s22, %s31
      %p125 = scmp.eq.s32.totalorder %s124, 0
      %s127 = sadd.s32 %s126, 1
      %s128 = scalar_select %p125, %s126, %s127
      %p131 = pneg %p125
      %p132 = scmp.eq.s32.totalorder %s13, 1
      %p133 = por %p131, %p132
      %p134 = scmp.ne.s32.totalorder %s126, %s129
      %p135 = scmp.eq.s32.totalorder %s13, 0
      %p136 = por %p134, %p135
      %p137 = scmp.ne.s32.totalorder %s126, %s129
      %p138 = scmp.eq.s32.totalorder %s18, 1
      %p139 = por %p137, %p138
      %p140 = scmp.ne.s32.totalorder %s129, %s130
      %p141 = scmp.eq.s32.totalorder %s18, 0
      %p142 = por %p140, %p141
      %p143 = scmp.ne.s32.totalorder %s129, %s130
      %p144 = scmp.eq.s32.totalorder %s19, 1
      %p145 = por %p143, %p144
      %p147 = scmp.ne.s32.totalorder %s130, %s146
      %p148 = scmp.eq.s32.totalorder %s19, 0
      %p149 = por %p147, %p148
      %s150 = ssub.s32 %s20, %s39
      %s151 = ssub.s32 %s21, %s35
      %s152 = sor.u32 %s150, %s151
      %p153 = scmp.eq.s32.totalorder %s152, 0
      %s155 = sadd.s32 %s154, 1
      %s156 = scalar_select %p153, %s154, %s155
      %p159 = pneg %p153
      %p160 = scmp.eq.s32.totalorder %s13, 1
      %p161 = por %p159, %p160
      %p162 = scmp.ne.s32.totalorder %s154, %s157
      %p163 = scmp.eq.s32.totalorder %s13, 0
      %p164 = por %p162, %p163
      %p165 = scmp.ne.s32.totalorder %s154, %s157
      %p166 = scmp.eq.s32.totalorder %s18, 1
      %p167 = por %p165, %p166
      %p168 = scmp.ne.s32.totalorder %s157, %s158
      %p169 = scmp.eq.s32.totalorder %s18, 0
      %p170 = por %p168, %p169
      %p171 = scmp.ne.s32.totalorder %s157, %s158
      %p172 = scmp.eq.s32.totalorder %s19, 1
      %p173 = por %p171, %p172
      %p175 = scmp.ne.s32.totalorder %s158, %s174
      %p176 = scmp.eq.s32.totalorder %s19, 0
      %p177 = por %p175, %p176
      %p178 = scmp.le.s32.totalorder 1, %s13
      %p179 = scmp.lt.s32.totalorder %s13, 3
      %p180 = pnand %p178, %p179
      %p181 = pneg %p180
      // Predicated region
      $region9: #{tpu_custom_call.1} parent=5 // pred_check
        _
      $region10: #{tpu_custom_call.1} parent=5 // pred_check_branch
        %183 = sbr.rel (%p180) target = $region12
      $region11: #{tpu_custom_call.1} parent=5 // pred_region
        %s184 = ssub.s32 %s13, 1
        // Predicated region
        $region13: #{tpu_custom_call.1} parent=11 // pred_check
          %p185 = pneg %p142
        $region14: #{tpu_custom_call.1} parent=11 // pred_check_branch
          %187 = sbr.rel (%p185) target = $region16
        $region15: #{tpu_custom_call.1} parent=11 // pred_region
          %p188 = scmp.lt.s32.totalorder %s25, 0
          %s189 = scalar_select %p188, %s25, 0
          %s190 = scalar_lea.vmem %s3, %s189
        $region16: #{tpu_custom_call.1} parent=11 // pred_fallthru
          _
      $region12: #{tpu_custom_call.1} parent=5 // pred_fallthru
        _
      %p191 = scmp.lt.s32.totalorder %s13, 2
      // Predicated region
      $region17: #{tpu_custom_call.1} parent=5 // pred_check
        %p192 = pneg %p191
      $region18: #{tpu_custom_call.1} parent=5 // pred_check_branch
        %194 = sbr.rel (%p192) target = $region20
      $region19: #{tpu_custom_call.1} parent=5 // pred_region
        // Predicated region
        $region21: #{tpu_custom_call.1} parent=19 // pred_check
          %p195 = pneg %p54
        $region22: #{tpu_custom_call.1} parent=19 // pred_check_branch
          %197 = sbr.rel (%p195) target = $region24
        $region23: #{tpu_custom_call.1} parent=19 // pred_region
          %p198 = scmp.lt.s32.totalorder %s20, 1
          %s199 = scalar_select %p198, %s20, 1
          %p200 = scmp.lt.s32.totalorder %s21, 0
          %s201 = scalar_select %p200, %s21, 0
          %s202 = sadd.s32 %s201, %s199
          %s203 = smul.addr %s202, 8
          %s204 = scalar_lea.vmem %s0, %s203
        $region24: #{tpu_custom_call.1} parent=19 // pred_fallthru
          _
        // Predicated region
        $region25: #{tpu_custom_call.1} parent=19 // pred_check
          %p205 = pneg %p82
        $region26: #{tpu_custom_call.1} parent=19 // pred_check_branch
          %207 = sbr.rel (%p205) target = $region28
        $region27: #{tpu_custom_call.1} parent=19 // pred_region
          %s208 = smul.u32 16, %s22
          %p209 = scmp.lt.s32.totalorder %s20, 1
          %s210 = scalar_select %p209, %s20, 1
          %p211 = scmp.lt.s32.totalorder %s208, 15
          %s212 = scalar_select %p211, %s208, 15
          %s213 = smul.addr %s210, 16
          %s214 = sadd.s32 %s212, %s213
          %s215 = smul.addr %s214, 8
          %s216 = scalar_lea.vmem %s1, %s215
          %s217 = smul.u32 16, %s22
        $region28: #{tpu_custom_call.1} parent=19 // pred_fallthru
          _
        // Predicated region
        $region29: #{tpu_custom_call.1} parent=19 // pred_check
          %p218 = pneg %p110
        $region30: #{tpu_custom_call.1} parent=19 // pred_check_branch
          %220 = sbr.rel (%p218) target = $region32
        $region31: #{tpu_custom_call.1} parent=19 // pred_region
          %s221 = smul.u32 16, %s22
          %p222 = scmp.lt.s32.totalorder %s20, 1
          %s223 = scalar_select %p222, %s20, 1
          %p224 = scmp.lt.s32.totalorder %s221, 15
          %s225 = scalar_select %p224, %s221, 15
          %s226 = smul.addr %s223, 16
          %s227 = sadd.s32 %s225, %s226
          %s228 = smul.addr %s227, 8
          %s229 = scalar_lea.vmem %s2, %s228
          %s230 = smul.u32 16, %s22
        $region32: #{tpu_custom_call.1} parent=19 // pred_fallthru
          _
      $region20: #{tpu_custom_call.1} parent=5 // pred_fallthru
        _
      %p231 = scmp.le.s32.totalorder 1, %s13
      %p232 = scmp.lt.s32.totalorder %s13, 3
      %p233 = pnand %p231, %p232
      %p234 = pneg %p233
      // Predicated region
      $region33: #{tpu_custom_call.1} parent=5 // pred_check
        _
      $region34: #{tpu_custom_call.1} parent=5 // pred_check_branch
        %236 = sbr.rel (%p233) target = $region36
      $region35: #{tpu_custom_call.1} parent=5 // pred_region
        %s237 = ssub.s32 %s13, 1
        %p238 = scmp.lt.s32.totalorder %s23, 1
        %s239 = scalar_select %p238, %s23, 1
        %p240 = scmp.lt.s32.totalorder %s24, 0
        %s241 = scalar_select %p240, %s24, 0
        %s242 = sadd.s32 %s241, %s239
        %s243 = smul.addr %s242, 8
        %s244 = scalar_lea.vmem %s0, %s243
        %p245 = pneg %p60
        %p246 = pneg %p57
        %s247 = smul.u32 16, %s25
        %p248 = scmp.lt.s32.totalorder %s23, 1
        %s249 = scalar_select %p248, %s23, 1
        %p250 = scmp.lt.s32.totalorder %s247, 15
        %s251 = scalar_select %p250, %s247, 15
        %s252 = smul.addr %s249, 16
        %s253 = sadd.s32 %s251, %s252
        %s254 = smul.addr %s253, 8
        %s255 = scalar_lea.vmem %s1, %s254
        %p256 = pneg %p88
        %p257 = pneg %p85
        %s258 = smul.u32 16, %s25
        %p259 = scmp.lt.s32.totalorder %s23, 1
        %s260 = scalar_select %p259, %s23, 1
        %p261 = scmp.lt.s32.totalorder %s258, 15
        %s262 = scalar_select %p261, %s258, 15
        %s263 = smul.addr %s260, 16
        %s264 = sadd.s32 %s262, %s263
        %s265 = smul.addr %s264, 8
        %s266 = scalar_lea.vmem %s2, %s265
        %p267 = pneg %p116
        %p268 = pneg %p113
        %p269 = scmp.lt.s32.totalorder %s25, 0
        %s270 = scalar_select %p269, %s25, 0
        %s271 = scalar_lea.vmem %s3, %s270
        %p272 = pneg %p142
        %p273 = pneg %p139
        %p274 = pneg %p170
        %p275 = pneg %p167
        %s276 = sand.u32 %s157, 1
        %s277 = scalar_lea.sflag [#allocation6], %s276
        %s278 = sand.u32 %s157, 1
        %s279 = smul.addr %s278, 8
        %s280 = scalar_lea.vmem [#allocation5], %s279
        %p281 = scmp.lt.s32.totalorder %s23, 1
        %s282 = scalar_select %p281, %s23, 1
        %p283 = scmp.lt.s32.totalorder %s24, 0
        %s284 = scalar_select %p283, %s24, 0
        %s285 = sadd.s32 %s284, %s282
        %s286 = smul.addr %s285, 8
        %s287 = scalar_lea.vmem %s0, %s286
        %s288 = smul.u32 16, %s25
        %p289 = scmp.lt.s32.totalorder %s23, 1
        %s290 = scalar_select %p289, %s23, 1
        %p291 = scmp.lt.s32.totalorder %s288, 15
        %s292 = scalar_select %p291, %s288, 15
        %s293 = smul.addr %s290, 16
        %s294 = sadd.s32 %s292, %s293
        %s295 = smul.addr %s294, 8
        %s296 = scalar_lea.vmem %s1, %s295
        %s297 = smul.u32 16, %s25
        %s298 = smul.u32 16, %s25
        %p299 = scmp.lt.s32.totalorder %s23, 1
        %s300 = scalar_select %p299, %s23, 1
        %p301 = scmp.lt.s32.totalorder %s298, 15
        %s302 = scalar_select %p301, %s298, 15
        %s303 = smul.addr %s300, 16
        %s304 = sadd.s32 %s302, %s303
        %s305 = smul.addr %s304, 8
        %s306 = scalar_lea.vmem %s2, %s305
        %s307 = smul.u32 16, %s25
        %p308 = scmp.lt.s32.totalorder %s25, 0
        %s309 = scalar_select %p308, %s25, 0
        %s310 = scalar_lea.vmem %s3, %s309
        %p311 = scmp.eq.s32.totalorder %s25, 0
        // Predicated region
        $region37: #{tpu_custom_call.1} parent=35 // pred_check
          %p312 = pneg %p311
        $region38: #{tpu_custom_call.1} parent=35 // pred_check_branch
          %314 = sbr.rel (%p312) target = $region40
        $region39: #{tpu_custom_call.1} parent=35 // pred_region
          %vm315 = vcmask 7168
          %316 = vst.msk [vmem:[#allocation2] sm:$0xff] %vm315, -inf
          %317 = vst.msk [vmem:[#allocation3] sm:$0xff] %vm315, 0.0
          %vm318 = vcmask 261120
          %319 = vst.msk [vmem:[#allocation4] sm:$0xff] %vm318, 0.0
        $region40: #{tpu_custom_call.1} parent=35 // pred_fallthru
          _
        %v320 = vld [vmem:[%s287] sm:$0xff]
        %v321 = vmul.f32 %v320, 0.17677669
        %v322 = vld [vmem:[%s296] sm:$0xff]
        %v323 = vld [vmem:[%s296 + $0x8] sm:$0xff]
        %v324 = vld [vmem:[%s296 + $0x10] sm:$0xff]
        %v325 = vld [vmem:[%s296 + $0x18] sm:$0xff]
        %v326 = vld [vmem:[%s296 + $0x20] sm:$0xff]
        %v327 = vld [vmem:[%s296 + $0x28] sm:$0xff]
        %v328 = vld [vmem:[%s296 + $0x30] sm:$0xff]
        %v329 = vld [vmem:[%s296 + $0x38] sm:$0xff]
        %v330 = vld [vmem:[%s296 + $0x40] sm:$0xff]
        %v331 = vld [vmem:[%s296 + $0x48] sm:$0xff]
        %v332 = vld [vmem:[%s296 + $0x50] sm:$0xff]
        %v333 = vld [vmem:[%s296 + $0x58] sm:$0xff]
        %v334 = vld [vmem:[%s296 + $0x60] sm:$0xff]
        %v335 = vld [vmem:[%s296 + $0x68] sm:$0xff]
        %v336 = vld [vmem:[%s296 + $0x70] sm:$0xff]
        %v337 = vld [vmem:[%s296 + $0x78] sm:$0xff]
        %v338 = vld [vmem:[%s306] sm:$0xff]
        %v339 = vld [vmem:[%s306 + $0x8] sm:$0xff]
        %v340 = vld [vmem:[%s306 + $0x10] sm:$0xff]
        %v341 = vld [vmem:[%s306 + $0x18] sm:$0xff]
        %v342 = vld [vmem:[%s306 + $0x20] sm:$0xff]
        %v343 = vld [vmem:[%s306 + $0x28] sm:$0xff]
        %v344 = vld [vmem:[%s306 + $0x30] sm:$0xff]
        %v345 = vld [vmem:[%s306 + $0x38] sm:$0xff]
        %v346 = vld [vmem:[%s306 + $0x40] sm:$0xff]
        %v347 = vld [vmem:[%s306 + $0x48] sm:$0xff]
        %v348 = vld [vmem:[%s306 + $0x50] sm:$0xff]
        %v349 = vld [vmem:[%s306 + $0x58] sm:$0xff]
        %v350 = vld [vmem:[%s306 + $0x60] sm:$0xff]
        %v351 = vld [vmem:[%s306 + $0x68] sm:$0xff]
        %v352 = vld [vmem:[%s306 + $0x70] sm:$0xff]
        %v353 = vld [vmem:[%s306 + $0x78] sm:$0xff]
        %v354 = vld [vmem:[%s310] sm:$0x1]
        %v356 = vlaneseq
        %v357 = vshrl.u32 %v356, 7
        %v358 = vsub.s32 0, %v357
        %v359 = vrot.slane %v354, %v358
        %vm361 = vcmask 261120
        %v363 = vsel %vm361, %v321, 0
        %v366 = vsel %vm361, %v322, 0
        %v369 = vsel %vm361, %v323, 0
        %v372 = vsel %vm361, %v324, 0
        %v375 = vsel %vm361, %v325, 0
        %v378 = vsel %vm361, %v326, 0
        %v381 = vsel %vm361, %v327, 0
        %v384 = vsel %vm361, %v328, 0
        %v387 = vsel %vm361, %v329, 0
        %v390 = vsel %vm361, %v330, 0
        %v393 = vsel %vm361, %v331, 0
        %v396 = vsel %vm361, %v332, 0
        %v399 = vsel %vm361, %v333, 0
        %v402 = vsel %vm361, %v334, 0
        %v405 = vsel %vm361, %v335, 0
        %v408 = vsel %vm361, %v336, 0
        %v411 = vsel %vm361, %v337, 0
        %413 = vmatprep.subr.mxu0 0.0
        %414 = vmatpush1.xpose.msra.mxu0 %v366
        %415 = vmatprep.subr.mxu0 0.0
        %416 = vmatpush1.xpose.msra.mxu0 %v369
        %417 = vmatprep.subr.mxu0 0.0
        %418 = vmatpush1.xpose.msra.mxu0 %v372
        %419 = vmatprep.subr.mxu0 0.0
        %420 = vmatpush1.xpose.msra.mxu0 %v375
        %421 = vmatprep.subr.mxu0 0.0
        %422 = vmatpush1.xpose.msra.mxu0 %v378
        %423 = vmatprep.subr.mxu0 0.0
        %424 = vmatpush1.xpose.msra.mxu0 %v381
        %425 = vmatprep.subr.mxu0 0.0
        %426 = vmatpush1.xpose.msra.mxu0 %v384
        %427 = vmatprep.subr.mxu0 0.0
        %428 = vmatpush1.xpose.msra.mxu0 %v387
        %429 = vmatprep.subr.mxu0 0.0
        %430 = vmatpush1.xpose.msra.mxu0 %v390
        %431 = vmatprep.subr.mxu0 0.0
        %432 = vmatpush1.xpose.msra.mxu0 %v393
        %433 = vmatprep.subr.mxu0 0.0
        %434 = vmatpush1.xpose.msra.mxu0 %v396
        %435 = vmatprep.subr.mxu0 0.0
        %436 = vmatpush1.xpose.msra.mxu0 %v399
        %437 = vmatprep.subr.mxu0 0.0
        %438 = vmatpush1.xpose.msra.mxu0 %v402
        %439 = vmatprep.subr.mxu0 0.0
        %440 = vmatpush1.xpose.msra.mxu0 %v405
        %441 = vmatprep.subr.mxu0 0.0
        %442 = vmatpush1.xpose.msra.mxu0 %v408
        %443 = vmatprep.subr.mxu0 0.0
        %444 = vmatpush1.xpose.msra.mxu0 %v411
        %445 = vmatprep.subr.mxu0 0.0
        %446 = vmatpush1.xpose.msra.mxu0 0.0
        %447 = vmatprep.subr.mxu0 0.0
        %448 = vmatpush1.xpose.msra.mxu0 0.0
        %449 = vmatprep.subr.mxu0 0.0
        %450 = vmatpush1.xpose.msra.mxu0 0.0
        %451 = vmatprep.subr.mxu0 0.0
        %452 = vmatpush1.xpose.msra.mxu0 0.0
        %453 = vmatprep.subr.mxu0 0.0
        %454 = vmatpush1.xpose.msra.mxu0 0.0
        %455 = vmatprep.subr.mxu0 0.0
        %456 = vmatpush1.xpose.msra.mxu0 0.0
        %457 = vmatprep.subr.mxu0 0.0
        %458 = vmatpush1.xpose.msra.mxu0 0.0
        %459 = vmatprep.subr.mxu0 0.0
        %460 = vmatpush1.xpose.msra.mxu0 0.0
        %461 = vmatprep.subr.mxu0 0.0
        %462 = vmatpush1.xpose.msra.mxu0 0.0
        %463 = vmatprep.subr.mxu0 0.0
        %464 = vmatpush1.xpose.msra.mxu0 0.0
        %465 = vmatprep.subr.mxu0 0.0
        %466 = vmatpush1.xpose.msra.mxu0 0.0
        %467 = vmatprep.subr.mxu0 0.0
        %468 = vmatpush1.xpose.msra.mxu0 0.0
        %469 = vmatprep.subr.mxu0 0.0
        %470 = vmatpush1.xpose.msra.mxu0 0.0
        %471 = vmatprep.subr.mxu0 0.0
        %472 = vmatpush1.xpose.msra.mxu0 0.0
        %473 = vmatprep.subr.mxu0 0.0
        %474 = vmatpush1.xpose.msra.mxu0 0.0
        %475 = vmatprep.subr.mxu0 0.0
        %476 = vmatpush1.xpose.msra.mxu0 0.0
        %477 = vmatprep.mubr.f32.mxu0 0.0
        %478 = vmatmul.mubr.f32.gmra.mrb[0].mxu0 %v363
        %v479 = vpop.f32.mrb[0].mxu0
        %v480 = vadd.f32 %v359, %v479
        %v481 = vpop.f32.mrb[0].mxu0
        %482 = vdwg.mxu0
        %v483 = vld [vmem:[#allocation2] sm:$0xff]
        %484 = vmax.xlane.f32.xlu0 %v480
        %v485 = vpop.xlane.xlu0 %484
        %v486 = vmax.f32 %v483, %v485
        %v487 = vsub.f32 %v483, %v486
        %v488 = vmul.f32 %v487, 1.442695
        %v489 = vpow.pop %v488
        %491 = vset.pattern.permute.xlu0 0
        %492 = vperm.xlu0 %491, %v486
        %v493 = vpop.permute.xlu0 %492
        %v495 = vsub.f32 %v480, %v493
        %v496 = vmul.f32 %v495, 1.442695
        %v497 = vpow.pop %v496
        %v498 = vld [vmem:[#allocation3] sm:$0xff]
        %v499 = vmul.f32 %v489, %v498
        %500 = vadd.xlane.f32.xlu0 %v497
        %v501 = vpop.xlane.xlu0 %500
        %v502 = vadd.f32 %v499, %v501
        %vm503 = vcmask 7168
        %504 = vst.msk [vmem:[#allocation3] sm:$0xff] %vm503, %v502
        %v505 = vld [vmem:[#allocation4] sm:$0xff]
        %507 = vset.pattern.permute.xlu0 0
        %508 = vperm.xlu0 %507, %v489
        %v509 = vpop.permute.xlu0 %508
        %v511 = vmul.f32 %v509, %v505
        %512 = vmatprep.subr.mxu0 0.0
        %513 = vmatpush1.msra.mxu0 %v338
        %514 = vmatprep.subr.mxu0 0.0
        %515 = vmatpush1.msra.mxu0 %v339
        %516 = vmatprep.subr.mxu0 0.0
        %517 = vmatpush1.msra.mxu0 %v340
        %518 = vmatprep.subr.mxu0 0.0
        %519 = vmatpush1.msra.mxu0 %v341
        %520 = vmatprep.subr.mxu0 0.0
        %521 = vmatpush1.msra.mxu0 %v342
        %522 = vmatprep.subr.mxu0 0.0
        %523 = vmatpush1.msra.mxu0 %v343
        %524 = vmatprep.subr.mxu0 0.0
        %525 = vmatpush1.msra.mxu0 %v344
        %526 = vmatprep.subr.mxu0 0.0
        %527 = vmatpush1.msra.mxu0 %v345
        %528 = vmatprep.subr.mxu0 0.0
        %529 = vmatpush1.msra.mxu0 %v346
        %530 = vmatprep.subr.mxu0 0.0
        %531 = vmatpush1.msra.mxu0 %v347
        %532 = vmatprep.subr.mxu0 0.0
        %533 = vmatpush1.msra.mxu0 %v348
        %534 = vmatprep.subr.mxu0 0.0
        %535 = vmatpush1.msra.mxu0 %v349
        %536 = vmatprep.subr.mxu0 0.0
        %537 = vmatpush1.msra.mxu0 %v350
        %538 = vmatprep.subr.mxu0 0.0
        %539 = vmatpush1.msra.mxu0 %v351
        %540 = vmatprep.subr.mxu0 0.0
        %541 = vmatpush1.msra.mxu0 %v352
        %542 = vmatprep.subr.mxu0 0.0
        %543 = vmatpush1.msra.mxu0 %v353
        %544 = vmatprep.subr.mxu0 0.0
        %545 = vmatpush1.msra.mxu0 0.0
        %546 = vmatprep.subr.mxu0 0.0
        %547 = vmatpush1.msra.mxu0 0.0
        %548 = vmatprep.subr.mxu0 0.0
        %549 = vmatpush1.msra.mxu0 0.0
        %550 = vmatprep.subr.mxu0 0.0
        %551 = vmatpush1.msra.mxu0 0.0
        %552 = vmatprep.subr.mxu0 0.0
        %553 = vmatpush1.msra.mxu0 0.0
        %554 = vmatprep.subr.mxu0 0.0
        %555 = vmatpush1.msra.mxu0 0.0
        %556 = vmatprep.subr.mxu0 0.0
        %557 = vmatpush1.msra.mxu0 0.0
        %558 = vmatprep.subr.mxu0 0.0
        %559 = vmatpush1.msra.mxu0 0.0
        %560 = vmatprep.subr.mxu0 0.0
        %561 = vmatpush1.msra.mxu0 0.0
        %562 = vmatprep.subr.mxu0 0.0
        %563 = vmatpush1.msra.mxu0 0.0
        %564 = vmatprep.subr.mxu0 0.0
        %565 = vmatpush1.msra.mxu0 0.0
        %566 = vmatprep.subr.mxu0 0.0
        %567 = vmatpush1.msra.mxu0 0.0
        %568 = vmatprep.subr.mxu0 0.0
        %569 = vmatpush1.msra.mxu0 0.0
        %570 = vmatprep.subr.mxu0 0.0
        %571 = vmatpush1.msra.mxu0 0.0
        %572 = vmatprep.subr.mxu0 0.0
        %573 = vmatpush1.msra.mxu0 0.0
        %574 = vmatprep.subr.mxu0 0.0
        %575 = vmatpush1.msra.mxu0 0.0
        %576 = vmatprep.mubr.f32.mxu0 0.0
        %577 = vmatmul.mubr.f32.gmra.mrb[0].mxu0 %v497
        %v578 = vpop.f32.mrb[0].mxu0
        %v579 = vadd.f32 0.0, %v578
        %v580 = vpop.f32.mrb[0].mxu0
        %581 = vdwg.mxu0
        %v582 = vadd.f32 %v511, %v579
        %583 = vst.msk [vmem:[#allocation4] sm:$0xff] %vm361, %v582
        %584 = vst.msk [vmem:[#allocation2] sm:$0xff] %vm503, %v486
        // Predicated region
        $region41: #{tpu_custom_call.1} parent=35 // pred_check
          %p585 = pneg %p311
        $region42: #{tpu_custom_call.1} parent=35 // pred_check_branch
          %587 = sbr.rel (%p585) target = $region44
        $region43: #{tpu_custom_call.1} parent=35 // pred_region
          %v588 = vld [vmem:[#allocation3] sm:$0xff]
          %v589 = vrcp.pop %v588
          %v590 = vld [vmem:[#allocation4] sm:$0xff]
          %592 = vset.pattern.permute.xlu0 0
          %593 = vperm.xlu0 %592, %v589
          %v594 = vpop.permute.xlu0 %593
          %v596 = vmul.f32 %v590, %v594
          %597 = vst.msk [vmem:[%s280] sm:$0xff] %vm361, %v596
        $region44: #{tpu_custom_call.1} parent=35 // pred_fallthru
          _
        %s598 = sand.u32 %s157, 1
        %s599 = scalar_lea.sflag [#allocation6], %s598
        %s600 = sand.u32 %s157, 1
        %s601 = smul.addr %s600, 8
        %s602 = scalar_lea.vmem [#allocation5], %s601
        // Predicated region
        $region45: #{tpu_custom_call.1} parent=35 // pred_check
          %p603 = pneg %p167
        $region46: #{tpu_custom_call.1} parent=35 // pred_check_branch
          %605 = sbr.rel (%p603) target = $region48
        $region47: #{tpu_custom_call.1} parent=35 // pred_region
          %s607 = ssub.s32 128, 128
          %608 = vsyncadd %s599, %s607
          %s609 = sadd.s32 %s24, %s23
          %s610 = smul.addr %s609, 128
          %s611 = scalar_lea.hbm %s4, %s610
          %s613 = sshll.u32 %s602, 4
          %s614 = int_to_ptr.vmem [resolvable:$true] %s613
          %616 = dma.vmem_to_hbm [thread:$0]  %s614, 128, %s611, %s599
        $region48: #{tpu_custom_call.1} parent=35 // pred_fallthru
          _
      $region36: #{tpu_custom_call.1} parent=5 // pred_fallthru
        _
      %p617 = scmp.le.s32.totalorder 2, %s13
      // Predicated region
      $region49: #{tpu_custom_call.1} parent=5 // pred_check
        %p618 = pneg %p617
      $region50: #{tpu_custom_call.1} parent=5 // pred_check_branch
        %620 = sbr.rel (%p618) target = $region52
      $region51: #{tpu_custom_call.1} parent=5 // pred_region
        %s621 = ssub.s32 %s13, 2
        // Predicated region
        $region53: #{tpu_custom_call.1} parent=51 // pred_check
          %p622 = pneg %p173
        $region54: #{tpu_custom_call.1} parent=51 // pred_check_branch
          %624 = sbr.rel (%p622) target = $region56
        $region55: #{tpu_custom_call.1} parent=51 // pred_region
          %s625 = sand.u32 %s158, 1
          %s626 = scalar_lea.sflag [#allocation6], %s625
          %s627 = sand.u32 %s158, 1
          %s628 = smul.addr %s627, 8
          %s629 = scalar_lea.vmem [#allocation5], %s628
          %630 = dma.done %s626, 128
        $region56: #{tpu_custom_call.1} parent=51 // pred_fallthru
          _
      $region52: #{tpu_custom_call.1} parent=5 // pred_fallthru
        _
    $region6: #{tpu_custom_call.1} parent=1 // loop_footer
      %s17 = sadd.s32 1, %s13
    $region7: #{tpu_custom_call.1} parent=1 // loop_footer_branch
      %12 = sbr.rel target = $region3
    $region8: #{tpu_custom_call.1} parent=1 // loop_exit
      _
    %631 = vsyncpa [#allocation6], 1
    %s632 = scalar_lea.sflag [#allocation6], 1
    %633 = vsyncpa %s632, 1

</llo_original>
